<compile_context>
chip_gen: v7x
topology: tpu7x:2x2x1
jax: 0.10.0
libtpu: 0.0.40
codegen_flags: <defaults>
</compile_context>

<pallas_src>
import jax
import jax.numpy as jnp
from jax.experimental import pallas as pl
from jax.experimental.pallas import tpu as pltpu


IN_FEATURES = 100          # per-branch width (concat -> 200)
H1, H2, H3, N_OUT = 512, 128, 32, 2
H3_PAD = 128               # lane-dense padding of the 32-wide layer-3 output
W4_NPAD = 8                # small lane padding of the 2-wide layer-4 output


def _round_up(x, m):
    return (x + m - 1) // m * m


def _cdiv(a, b):
    return -(-a // b)


def _mlp_kernel(x1_ref, x2_ref,
                w1a_ref, w1b_ref, b1_ref,
                w2_ref, b2_ref,
                w3_ref, b3_ref,
                w4_ref, b4_ref,
                o_ref):
    # Activations arrive f32, are cast to bf16 for the MXU; accumulation and
    # all VPU work (bias add, ReLU) stay f32.
    x1 = x1_ref[...].astype(jnp.bfloat16)
    x2 = x2_ref[...].astype(jnp.bfloat16)

    # Fused concat: cat([x1, x2], 1) @ W1 == x1 @ W1[:100] + x2 @ W1[100:]
    h = (jnp.dot(x1, w1a_ref[...], preferred_element_type=jnp.float32)
         + jnp.dot(x2, w1b_ref[...], preferred_element_type=jnp.float32)
         + b1_ref[...])
    h = jnp.maximum(h, 0.0).astype(jnp.bfloat16)

    h = jnp.dot(h, w2_ref[...], preferred_element_type=jnp.float32) + b2_ref[...]
    h = jnp.maximum(h, 0.0).astype(jnp.bfloat16)

    # Layer 3 keeps a lane-dense 128-wide output (padded lanes are exact zeros).
    h = jnp.dot(h, w3_ref[...], preferred_element_type=jnp.float32) + b3_ref[...]
    h = jnp.maximum(h, 0.0).astype(jnp.bfloat16)

    # Layer 4: (TB,128)@(128,8) -> (TB,8); store only the 2 useful lanes.
    out = jnp.dot(h, w4_ref[...], preferred_element_type=jnp.float32) + b4_ref[...]
    o_ref[...] = out[:, :N_OUT].astype(o_ref.dtype)   # narrow (TB, 2) store


def prepare_params(params):
    """Repack torch-layout f32 params for the kernel.

    Input: [(w1 (200,512), b1 (1,512)), (w2 (512,128), b2 (1,128)),
            (w3 (128,32),  b3 (1,32)),  (w4 (32,2),   b4 (1,2))]
    Output: split first-layer weight, bf16 weights, f32 biases; layer-3
            padded to 128 lanes, layer-4 padded to 8 lanes.
    """
    (w1, b1), (w2, b2), (w3, b3), (w4, b4) = params
    w1a = w1[:IN_FEATURES].astype(jnp.bfloat16)                 # (100, 512)
    w1b = w1[IN_FEATURES:].astype(jnp.bfloat16)                 # (100, 512)
    w2b = w2.astype(jnp.bfloat16)                               # (512, 128)
    w3p = jnp.zeros((H2, H3_PAD), jnp.float32).at[:, :H3].set(w3).astype(jnp.bfloat16)
    b3p = jnp.zeros((1, H3_PAD), jnp.float32).at[:, :H3].set(b3)
    w4p = jnp.zeros((H3_PAD, W4_NPAD), jnp.float32).at[:H3, :N_OUT].set(w4).astype(jnp.bfloat16)
    b4p = jnp.zeros((1, W4_NPAD), jnp.float32).at[:, :N_OUT].set(b4)
    return (w1a, w1b, b1.astype(jnp.float32),
            w2b, b2.astype(jnp.float32),
            w3p, b3p, w4p, b4p)


def siamese_forward(input1, input2, kparams, *, tb=2048):
    """input1, input2: (B, 100) float32. Returns (B, 2) float32."""
    # TODO(synk): dropout_rate > 0.0 (train-mode stochastic masking) not
    # implemented; module default is 0.0 which is an exact identity.
    B = input1.shape[0]

    # Balanced tile selection:
    #  * never pad by more than one small remainder (TB ~= cdiv(B, n_tiles)),
    #  * TB always a multiple of 8 sublanes,
    #  * for large batches force >= 4 grid steps (2 per TensorCore on v7x) so
    #    dimension_semantics=("parallel",) actually shards the batch and
    #    BlockSpec double-buffering overlaps DMA with compute.
    n_tiles = max(_cdiv(B, tb), 1)
    MIN_STEPS = 4
    if B >= MIN_STEPS * 256:
        n_tiles = max(n_tiles, MIN_STEPS)
    TB = _round_up(_cdiv(B, n_tiles), 8)
    B_pad = _round_up(B, TB)
    if B_pad != B:
        pad = ((0, B_pad - B), (0, 0))
        input1 = jnp.pad(input1, pad)
        input2 = jnp.pad(input2, pad)

    (w1a, w1b, b1, w2, b2, w3, b3, w4, b4) = kparams

    def const(arr):  # weight/bias resident in VMEM across all batch tiles
        return pl.BlockSpec(arr.shape, lambda i: (0, 0))

    flops_per_row = 2 * (2 * IN_FEATURES * H1 + H1 * H2 + H2 * H3 + H3 * N_OUT)
    weight_bytes = sum(int(a.size) * a.dtype.itemsize for a in kparams)
    cost = pl.CostEstimate(
        flops=B_pad * flops_per_row,
        transcendentals=0,
        bytes_accessed=B_pad * (2 * IN_FEATURES * 4 + N_OUT * 4) + weight_bytes,
    )

    out = pl.pallas_call(
        _mlp_kernel,
        out_shape=jax.ShapeDtypeStruct((B_pad, N_OUT), jnp.float32),
        grid=(B_pad // TB,),
        in_specs=[
            pl.BlockSpec((TB, IN_FEATURES), lambda i: (i, 0)),   # x1 tile
            pl.BlockSpec((TB, IN_FEATURES), lambda i: (i, 0)),   # x2 tile
            const(w1a), const(w1b), const(b1),
            const(w2), const(b2),
            const(w3), const(b3),
            const(w4), const(b4),
        ],
        out_specs=pl.BlockSpec((TB, N_OUT), lambda i: (i, 0)),   # narrow output
        compiler_params=pltpu.CompilerParams(
            dimension_semantics=("parallel",),        # megacore / v7x 2-TC split
            vmem_limit_bytes=48 * 1024 * 1024,        # fits v7x's 64 MiB VMEM
        ),
        cost_estimate=cost,
    )(input1, input2, w1a, w1b, b1, w2, b2, w3, b3, w4, b4)

    return out[:B]


def init_params(key):
    """Deterministic init mimicking nn.Linear's U(-1/sqrt(fan_in), 1/sqrt(fan_in))."""
    dims = [(200, 512), (512, 128), (128, 32), (32, 2)]
    params = []
    for (fan_in, fan_out) in dims:
        key, kw, kb = jax.random.split(key, 3)
        bound = 1.0 / jnp.sqrt(jnp.float32(fan_in))
        w = jax.random.uniform(kw, (fan_in, fan_out), jnp.float32, -bound, bound)
        b = jax.random.uniform(kb, (1, fan_out), jnp.float32, -bound, bound)
        params.append((w, b))
    return params


def reference_forward(input1, input2, params):
    x = jnp.concatenate([input1, input2], axis=1)
    (w1, b1), (w2, b2), (w3, b3), (w4, b4) = params
    h = jnp.maximum(x @ w1 + b1, 0.0)
    h = jnp.maximum(h @ w2 + b2, 0.0)
    h = jnp.maximum(h @ w3 + b3, 0.0)
    return h @ w4 + b4


if __name__ == "__main__":
    key = jax.random.PRNGKey(0)
    k1, k2, kp = jax.random.split(key, 3)

    B = 2
    input1 = jax.random.normal(k1, (B, 100), jnp.float32)
    input2 = jax.random.normal(k2, (B, 100), jnp.float32)
    params = init_params(kp)
    kparams = prepare_params(params)

    out = siamese_forward(input1, input2, kparams)
    out = jax.block_until_ready(out)

    ref = reference_forward(input1, input2, params)
    assert out.shape == (B, N_OUT)
    # bf16 MXU operands (f32 accumulate) vs f32 reference -> relaxed tolerance.
    assert jnp.allclose(out, ref, atol=5e-2, rtol=5e-2), "mismatch vs JAX reference"

    print("KERNEL_OK")
</pallas_src>

<mosaic_0001>
module attributes {stable_mosaic.version = 11 : i64} {
  func.func @_mlp_kernel(%arg0: i32, %arg1: memref<8x100xf32, #tpu.memory_space<vmem>>, %arg2: memref<8x100xf32, #tpu.memory_space<vmem>>, %arg3: memref<100x512xbf16, #tpu.memory_space<vmem>>, %arg4: memref<100x512xbf16, #tpu.memory_space<vmem>>, %arg5: memref<1x512xf32, #tpu.memory_space<vmem>>, %arg6: memref<512x128xbf16, #tpu.memory_space<vmem>>, %arg7: memref<1x128xf32, #tpu.memory_space<vmem>>, %arg8: memref<128x128xbf16, #tpu.memory_space<vmem>>, %arg9: memref<1x128xf32, #tpu.memory_space<vmem>>, %arg10: memref<128x8xbf16, #tpu.memory_space<vmem>>, %arg11: memref<1x8xf32, #tpu.memory_space<vmem>>, %arg12: memref<8x2xf32, #tpu.memory_space<vmem>>) attributes {dimension_semantics = [#tpu.dimension_semantics<parallel>], iteration_bounds = array<i64: 1>, scalar_prefetch = 0 : i64, scratch_operands = 0 : i64, tpu.core_type = #tpu.core_type<tc>, window_params = [{transform_indices = @transform_0, window_bounds = array<i64: 8, 100>}, {transform_indices = @transform_1, window_bounds = array<i64: 8, 100>}, {pipeline_mode = #tpu.pipeline_mode<synchronous>, transform_indices = @transform_2, window_bounds = array<i64: 100, 512>}, {pipeline_mode = #tpu.pipeline_mode<synchronous>, transform_indices = @transform_3, window_bounds = array<i64: 100, 512>}, {pipeline_mode = #tpu.pipeline_mode<synchronous>, transform_indices = @transform_4, window_bounds = array<i64: 1, 512>}, {pipeline_mode = #tpu.pipeline_mode<synchronous>, transform_indices = @transform_5, window_bounds = array<i64: 512, 128>}, {pipeline_mode = #tpu.pipeline_mode<synchronous>, transform_indices = @transform_6, window_bounds = array<i64: 1, 128>}, {pipeline_mode = #tpu.pipeline_mode<synchronous>, transform_indices = @transform_7, window_bounds = array<i64: 128, 128>}, {pipeline_mode = #tpu.pipeline_mode<synchronous>, transform_indices = @transform_8, window_bounds = array<i64: 1, 128>}, {pipeline_mode = #tpu.pipeline_mode<synchronous>, transform_indices = @transform_9, window_bounds = array<i64: 128, 8>}, {pipeline_mode = #tpu.pipeline_mode<synchronous>, transform_indices = @transform_10, window_bounds = array<i64: 1, 8>}, {transform_indices = @transform_11, window_bounds = array<i64: 8, 2>}]} {
    %c0 = arith.constant 0 : index
    %c0_0 = arith.constant 0 : index
    %0 = vector.load %arg1[%c0, %c0_0] : memref<8x100xf32, #tpu.memory_space<vmem>>, vector<8x100xf32>
    %1 = arith.truncf %0 : vector<8x100xf32> to vector<8x100xbf16>
    %c0_1 = arith.constant 0 : index
    %c0_2 = arith.constant 0 : index
    %2 = vector.load %arg2[%c0_1, %c0_2] : memref<8x100xf32, #tpu.memory_space<vmem>>, vector<8x100xf32>
    %3 = arith.truncf %2 : vector<8x100xf32> to vector<8x100xbf16>
    %c0_3 = arith.constant 0 : index
    %c0_4 = arith.constant 0 : index
    %4 = vector.load %arg3[%c0_3, %c0_4] : memref<100x512xbf16, #tpu.memory_space<vmem>>, vector<100x512xbf16>
    %cst = arith.constant dense<0.000000e+00> : vector<8x512xf32>
    %5 = tpu.matmul %1, %4, %cst {dimension_numbers = #tpu.dot_dimension_numbers<[1], [0], [0], [1], [0, 0, 1, 1], [], []>} : vector<8x100xbf16>, vector<100x512xbf16>, vector<8x512xf32> -> vector<8x512xf32>
    %c0_5 = arith.constant 0 : index
    %c0_6 = arith.constant 0 : index
    %6 = vector.load %arg4[%c0_5, %c0_6] : memref<100x512xbf16, #tpu.memory_space<vmem>>, vector<100x512xbf16>
    %cst_7 = arith.constant dense<0.000000e+00> : vector<8x512xf32>
    %7 = tpu.matmul %3, %6, %cst_7 {dimension_numbers = #tpu.dot_dimension_numbers<[1], [0], [0], [1], [0, 0, 1, 1], [], []>} : vector<8x100xbf16>, vector<100x512xbf16>, vector<8x512xf32> -> vector<8x512xf32>
    %8 = arith.addf %5, %7 : vector<8x512xf32>
    %c0_8 = arith.constant 0 : index
    %c0_9 = arith.constant 0 : index
    %9 = vector.load %arg5[%c0_8, %c0_9] : memref<1x512xf32, #tpu.memory_space<vmem>>, vector<1x512xf32>
    %10 = vector.broadcast %9 : vector<1x512xf32> to vector<8x512xf32>
    %11 = arith.addf %8, %10 : vector<8x512xf32>
    %cst_10 = arith.constant 0.000000e+00 : f32
    %12 = vector.broadcast %cst_10 : f32 to vector<8x512xf32>
    %13 = arith.maximumf %11, %12 : vector<8x512xf32>
    %14 = arith.truncf %13 : vector<8x512xf32> to vector<8x512xbf16>
    %c0_11 = arith.constant 0 : index
    %c0_12 = arith.constant 0 : index
    %15 = vector.load %arg6[%c0_11, %c0_12] : memref<512x128xbf16, #tpu.memory_space<vmem>>, vector<512x128xbf16>
    %cst_13 = arith.constant dense<0.000000e+00> : vector<8x128xf32>
    %16 = tpu.matmul %14, %15, %cst_13 {dimension_numbers = #tpu.dot_dimension_numbers<[1], [0], [0], [1], [0, 0, 1, 1], [], []>} : vector<8x512xbf16>, vector<512x128xbf16>, vector<8x128xf32> -> vector<8x128xf32>
    %c0_14 = arith.constant 0 : index
    %c0_15 = arith.constant 0 : index
    %17 = vector.load %arg7[%c0_14, %c0_15] : memref<1x128xf32, #tpu.memory_space<vmem>>, vector<1x128xf32>
    %18 = vector.broadcast %17 : vector<1x128xf32> to vector<8x128xf32>
    %19 = arith.addf %16, %18 : vector<8x128xf32>
    %cst_16 = arith.constant 0.000000e+00 : f32
    %20 = vector.broadcast %cst_16 : f32 to vector<8x128xf32>
    %21 = arith.maximumf %19, %20 : vector<8x128xf32>
    %22 = arith.truncf %21 : vector<8x128xf32> to vector<8x128xbf16>
    %c0_17 = arith.constant 0 : index
    %c0_18 = arith.constant 0 : index
    %23 = vector.load %arg8[%c0_17, %c0_18] : memref<128x128xbf16, #tpu.memory_space<vmem>>, vector<128x128xbf16>
    %cst_19 = arith.constant dense<0.000000e+00> : vector<8x128xf32>
    %24 = tpu.matmul %22, %23, %cst_19 {dimension_numbers = #tpu.dot_dimension_numbers<[1], [0], [0], [1], [0, 0, 1, 1], [], []>} : vector<8x128xbf16>, vector<128x128xbf16>, vector<8x128xf32> -> vector<8x128xf32>
    %c0_20 = arith.constant 0 : index
    %c0_21 = arith.constant 0 : index
    %25 = vector.load %arg9[%c0_20, %c0_21] : memref<1x128xf32, #tpu.memory_space<vmem>>, vector<1x128xf32>
    %26 = vector.broadcast %25 : vector<1x128xf32> to vector<8x128xf32>
    %27 = arith.addf %24, %26 : vector<8x128xf32>
    %cst_22 = arith.constant 0.000000e+00 : f32
    %28 = vector.broadcast %cst_22 : f32 to vector<8x128xf32>
    %29 = arith.maximumf %27, %28 : vector<8x128xf32>
    %30 = arith.truncf %29 : vector<8x128xf32> to vector<8x128xbf16>
    %c0_23 = arith.constant 0 : index
    %c0_24 = arith.constant 0 : index
    %31 = vector.load %arg10[%c0_23, %c0_24] : memref<128x8xbf16, #tpu.memory_space<vmem>>, vector<128x8xbf16>
    %cst_25 = arith.constant dense<0.000000e+00> : vector<8x8xf32>
    %32 = tpu.matmul %30, %31, %cst_25 {dimension_numbers = #tpu.dot_dimension_numbers<[1], [0], [0], [1], [0, 0, 1, 1], [], []>} : vector<8x128xbf16>, vector<128x8xbf16>, vector<8x8xf32> -> vector<8x8xf32>
    %c0_26 = arith.constant 0 : index
    %c0_27 = arith.constant 0 : index
    %33 = vector.load %arg11[%c0_26, %c0_27] : memref<1x8xf32, #tpu.memory_space<vmem>>, vector<1x8xf32>
    %34 = vector.broadcast %33 : vector<1x8xf32> to vector<8x8xf32>
    %35 = arith.addf %32, %34 : vector<8x8xf32>
    %36 = vector.extract_strided_slice %35 {offsets = [0, 0], sizes = [8, 2], strides = [1, 1]} : vector<8x8xf32> to vector<8x2xf32>
    %c0_28 = arith.constant 0 : index
    %c0_29 = arith.constant 0 : index
    %37 = vector.load %arg12[%c0_28, %c0_29] : memref<8x2xf32, #tpu.memory_space<vmem>>, vector<8x2xf32>
    tpu.vector_store %arg12[%c0_28, %c0_29], %36 {strides = array<i32>} : memref<8x2xf32, #tpu.memory_space<vmem>>, vector<8x2xf32>,
    return
  }
  func.func @transform_0(%arg0: i32) -> (i32, i32) {
    %c0_i32 = arith.constant 0 : i32
    %c0_i32_0 = arith.constant 0 : i32
    return %arg0, %c0_i32 : i32, i32
  }
  func.func @transform_1(%arg0: i32) -> (i32, i32) {
    %c0_i32 = arith.constant 0 : i32
    %c0_i32_0 = arith.constant 0 : i32
    return %arg0, %c0_i32 : i32, i32
  }
  func.func @transform_2(%arg0: i32) -> (i32, i32) {
    %c0_i32 = arith.constant 0 : i32
    %c0_i32_0 = arith.constant 0 : i32
    %c0_i32_1 = arith.constant 0 : i32
    return %c0_i32, %c0_i32_0 : i32, i32
  }
  func.func @transform_3(%arg0: i32) -> (i32, i32) {
    %c0_i32 = arith.constant 0 : i32
    %c0_i32_0 = arith.constant 0 : i32
    %c0_i32_1 = arith.constant 0 : i32
    return %c0_i32, %c0_i32_0 : i32, i32
  }
  func.func @transform_4(%arg0: i32) -> (i32, i32) {
    %c0_i32 = arith.constant 0 : i32
    %c0_i32_0 = arith.constant 0 : i32
    %c0_i32_1 = arith.constant 0 : i32
    return %c0_i32, %c0_i32_0 : i32, i32
  }
  func.func @transform_5(%arg0: i32) -> (i32, i32) {
    %c0_i32 = arith.constant 0 : i32
    %c0_i32_0 = arith.constant 0 : i32
    %c0_i32_1 = arith.constant 0 : i32
    return %c0_i32, %c0_i32_0 : i32, i32
  }
  func.func @transform_6(%arg0: i32) -> (i32, i32) {
    %c0_i32 = arith.constant 0 : i32
    %c0_i32_0 = arith.constant 0 : i32
    %c0_i32_1 = arith.constant 0 : i32
    return %c0_i32, %c0_i32_0 : i32, i32
  }
  func.func @transform_7(%arg0: i32) -> (i32, i32) {
    %c0_i32 = arith.constant 0 : i32
    %c0_i32_0 = arith.constant 0 : i32
    %c0_i32_1 = arith.constant 0 : i32
    return %c0_i32, %c0_i32_0 : i32, i32
  }
  func.func @transform_8(%arg0: i32) -> (i32, i32) {
    %c0_i32 = arith.constant 0 : i32
    %c0_i32_0 = arith.constant 0 : i32
    %c0_i32_1 = arith.constant 0 : i32
    return %c0_i32, %c0_i32_0 : i32, i32
  }
  func.func @transform_9(%arg0: i32) -> (i32, i32) {
    %c0_i32 = arith.constant 0 : i32
    %c0_i32_0 = arith.constant 0 : i32
    %c0_i32_1 = arith.constant 0 : i32
    return %c0_i32, %c0_i32_0 : i32, i32
  }
  func.func @transform_10(%arg0: i32) -> (i32, i32) {
    %c0_i32 = arith.constant 0 : i32
    %c0_i32_0 = arith.constant 0 : i32
    %c0_i32_1 = arith.constant 0 : i32
    return %c0_i32, %c0_i32_0 : i32, i32
  }
  func.func @transform_11(%arg0: i32) -> (i32, i32) {
    %c0_i32 = arith.constant 0 : i32
    %c0_i32_0 = arith.constant 0 : i32
    return %arg0, %c0_i32 : i32, i32
  }
}

</mosaic_0001>

<llo_original>
// kernel: tpu_custom_call.1
$region0: #{tpu_custom_call.1}
  #allocation0 [shape = 'u32[]', space=smem, size = 0x4, offset = 0x4, fixed_abs, tag = 'smem constant byte address 0x4 - core index']
  #allocation1 [shape = 'u32[144,128]{1,0:T(1,128)}', space=vmem, size = 0x12000, scoped, tag = 'internal scratch']
  %s0 = inlined_call_operand.vmem [shape: f32[8,100], index: 0, kind: input, shape index: {}]
  %s1 = inlined_call_operand.vmem [shape: f32[8,100], index: 1, kind: input, shape index: {}]
  %s2 = inlined_call_operand.hbm [shape: bf16[100,512], index: 2, kind: input, shape index: {}]
  %s3 = inlined_call_operand.hbm [shape: bf16[100,512], index: 3, kind: input, shape index: {}]
  %s4 = inlined_call_operand.vmem [shape: f32[1,512], index: 4, kind: input, shape index: {}]
  %s5 = inlined_call_operand.hbm [shape: bf16[512,128], index: 5, kind: input, shape index: {}]
  %s6 = inlined_call_operand.vmem [shape: f32[1,128], index: 6, kind: input, shape index: {}]
  %s7 = inlined_call_operand.vmem [shape: bf16[128,128], index: 7, kind: input, shape index: {}]
  %s8 = inlined_call_operand.vmem [shape: f32[1,128], index: 8, kind: input, shape index: {}]
  %s9 = inlined_call_operand.vmem [shape: bf16[128,8], index: 9, kind: input, shape index: {}]
  %s10 = inlined_call_operand.vmem [shape: f32[1,8], index: 10, kind: input, shape index: {}]
  %s11 = inlined_call_operand.vmem [shape: f32[8,2], index: 11, kind: output, shape index: {}]
  %s12 = sld [smem:[#allocation0]]
  $region66: #{tpu_custom_call.1} parent=0
    _
  %s14 = ssub.s32 1, %s12
  %s15 = scalar_select 0, %s14, %s12
  $region1: #{tpu_custom_call.1} parent=0
    #allocation2 [shape = 'u8[106496]{0}', space=vmem, size = 0x1a000, scoped, tag = 'input window, operand 2, single buffered']
    #allocation3 [shape = 's32[1]{0}', space=sflag, size = 0x4, scoped, tag = 'scoped memory for tpu_custom_call.1']
    #allocation4 [shape = 'u8[106496]{0}', space=vmem, size = 0x1a000, scoped, tag = 'input window, operand 3, single buffered']
    #allocation5 [shape = 's32[1]{0}', space=sflag, size = 0x4, scoped, tag = 'scoped memory for tpu_custom_call.1']
    #allocation6 [shape = 'u8[131072]{0}', space=vmem, size = 0x20000, scoped, tag = 'input window, operand 5, single buffered']
    %16 = vsyncpa [#allocation3], 0
    %17 = vsyncpa [#allocation5], 0
    // Predicated region
    $region2: #{tpu_custom_call.1} parent=1 // pred_check
      _
    $region3: #{tpu_custom_call.1} parent=1 // pred_check_branch
      %19 = sbr.rel (0) target = $region5
    $region4: #{tpu_custom_call.1} parent=1 // pred_region
      _
    $region5: #{tpu_custom_call.1} parent=1 // pred_fallthru
      _
    // Predicated region
    $region6: #{tpu_custom_call.1} parent=1 // pred_check
      _
    $region7: #{tpu_custom_call.1} parent=1 // pred_check_branch
      %21 = sbr.rel (0) target = $region9
    $region8: #{tpu_custom_call.1} parent=1 // pred_region
      _
    $region9: #{tpu_custom_call.1} parent=1 // pred_fallthru
      _
    // Predicated region
    $region10: #{tpu_custom_call.1} parent=1 // pred_check
      _
    $region11: #{tpu_custom_call.1} parent=1 // pred_check_branch
      %23 = sbr.rel (0) target = $region13
    $region12: #{tpu_custom_call.1} parent=1 // pred_region
      %s25 = ssub.s32 3328, 3328
      %26 = vsyncadd [#allocation3], %s25
      %s27 = sshll.u32 [#allocation2], 4
      %s28 = int_to_ptr.vmem [resolvable:$true] %s27
      %33 = dma.hbm_to_vmem [thread:$0]  %s2, 3328, %s28, [#allocation3], 256, 256, 16
    $region13: #{tpu_custom_call.1} parent=1 // pred_fallthru
      _
    // Predicated region
    $region14: #{tpu_custom_call.1} parent=1 // pred_check
      _
    $region15: #{tpu_custom_call.1} parent=1 // pred_check_branch
      %35 = sbr.rel (0) target = $region17
    $region16: #{tpu_custom_call.1} parent=1 // pred_region
      %s37 = ssub.s32 3328, 3328
      %38 = vsyncadd [#allocation5], %s37
      %s39 = sshll.u32 [#allocation4], 4
      %s40 = int_to_ptr.vmem [resolvable:$true] %s39
      %45 = dma.hbm_to_vmem [thread:$0]  %s3, 3328, %s40, [#allocation5], 256, 256, 16
    $region17: #{tpu_custom_call.1} parent=1 // pred_fallthru
      _
    // Predicated region
    $region18: #{tpu_custom_call.1} parent=1 // pred_check
      _
    $region19: #{tpu_custom_call.1} parent=1 // pred_check_branch
      %47 = sbr.rel (0) target = $region21
    $region20: #{tpu_custom_call.1} parent=1 // pred_region
      _
    $region21: #{tpu_custom_call.1} parent=1 // pred_fallthru
      _
    // Predicated region
    $region22: #{tpu_custom_call.1} parent=1 // pred_check
      _
    $region23: #{tpu_custom_call.1} parent=1 // pred_check_branch
      %49 = sbr.rel (0) target = $region25
    $region24: #{tpu_custom_call.1} parent=1 // pred_region
      %s51 = ssub.s32 4096, 4096
      %52 = vsyncadd [#allocation5], %s51
      %s53 = sshll.u32 [#allocation6], 4
      %s54 = int_to_ptr.vmem [resolvable:$true] %s53
      %59 = dma.hbm_to_vmem [thread:$0]  %s5, 4096, %s54, [#allocation5], 64, 64, 4
    $region25: #{tpu_custom_call.1} parent=1 // pred_fallthru
      _
    // Predicated region
    $region26: #{tpu_custom_call.1} parent=1 // pred_check
      _
    $region27: #{tpu_custom_call.1} parent=1 // pred_check_branch
      %61 = sbr.rel (0) target = $region29
    $region28: #{tpu_custom_call.1} parent=1 // pred_region
      _
    $region29: #{tpu_custom_call.1} parent=1 // pred_fallthru
      _
    // Predicated region
    $region30: #{tpu_custom_call.1} parent=1 // pred_check
      _
    $region31: #{tpu_custom_call.1} parent=1 // pred_check_branch
      %63 = sbr.rel (0) target = $region33
    $region32: #{tpu_custom_call.1} parent=1 // pred_region
      _
    $region33: #{tpu_custom_call.1} parent=1 // pred_fallthru
      _
    // Predicated region
    $region34: #{tpu_custom_call.1} parent=1 // pred_check
      _
    $region35: #{tpu_custom_call.1} parent=1 // pred_check_branch
      %65 = sbr.rel (0) target = $region37
    $region36: #{tpu_custom_call.1} parent=1 // pred_region
      _
    $region37: #{tpu_custom_call.1} parent=1 // pred_fallthru
      _
    // Predicated region
    $region38: #{tpu_custom_call.1} parent=1 // pred_check
      _
    $region39: #{tpu_custom_call.1} parent=1 // pred_check_branch
      %67 = sbr.rel (0) target = $region41
    $region40: #{tpu_custom_call.1} parent=1 // pred_region
      _
    $region41: #{tpu_custom_call.1} parent=1 // pred_fallthru
      _
    // Predicated region
    $region42: #{tpu_custom_call.1} parent=1 // pred_check
      _
    $region43: #{tpu_custom_call.1} parent=1 // pred_check_branch
      %69 = sbr.rel (0) target = $region45
    $region44: #{tpu_custom_call.1} parent=1 // pred_region
      _
    $region45: #{tpu_custom_call.1} parent=1 // pred_fallthru
      _
    // Predicated region
    $region46: #{tpu_custom_call.1} parent=1 // pred_check
      _
    $region47: #{tpu_custom_call.1} parent=1 // pred_check_branch
      %71 = sbr.rel (0) target = $region49
    $region48: #{tpu_custom_call.1} parent=1 // pred_region
      %72 = dma.done [#allocation3], 3328
    $region49: #{tpu_custom_call.1} parent=1 // pred_fallthru
      _
    // Predicated region
    $region50: #{tpu_custom_call.1} parent=1 // pred_check
      _
    $region51: #{tpu_custom_call.1} parent=1 // pred_check_branch
      %74 = sbr.rel (0) target = $region53
    $region52: #{tpu_custom_call.1} parent=1 // pred_region
      %75 = dma.done [#allocation5], 3328
    $region53: #{tpu_custom_call.1} parent=1 // pred_fallthru
      _
    // Predicated region
    $region54: #{tpu_custom_call.1} parent=1 // pred_check
      _
    $region55: #{tpu_custom_call.1} parent=1 // pred_check_branch
      %77 = sbr.rel (0) target = $region57
    $region56: #{tpu_custom_call.1} parent=1 // pred_region
      %78 = dma.done [#allocation5], 4096
    $region57: #{tpu_custom_call.1} parent=1 // pred_fallthru
      _
    %v80 = vld [vmem:[%s0] sm:$0xff]
    %v81 = vpack.c.bf16 %v80, %v80
    %v82 = vld [vmem:[%s1] sm:$0xff]
    %v83 = vpack.c.bf16 %v82, %v82
    %v84 = vld [vmem:[#allocation2] sm:$0xff]
    %v85 = vld [vmem:[#allocation2 + $0x8] sm:$0xff]
    %v86 = vld [vmem:[#allocation2 + $0x10] sm:$0xff]
    %v87 = vld [vmem:[#allocation2 + $0x18] sm:$0xff]
    %v88 = vld [vmem:[#allocation2 + $0x20] sm:$0xff]
    %v89 = vld [vmem:[#allocation2 + $0x28] sm:$0xff]
    %v90 = vld [vmem:[#allocation2 + $0x30] sm:$0xff]
    %v91 = vld [vmem:[#allocation2 + $0x38] sm:$0xff]
    %v92 = vld [vmem:[#allocation2 + $0x40] sm:$0xff]
    %v93 = vld [vmem:[#allocation2 + $0x48] sm:$0xff]
    %v94 = vld [vmem:[#allocation2 + $0x50] sm:$0xff]
    %v95 = vld [vmem:[#allocation2 + $0x58] sm:$0xff]
    %v96 = vld [vmem:[#allocation2 + $0x60] sm:$0xff]
    %v97 = vld [vmem:[#allocation2 + $0x68] sm:$0xff]
    %v98 = vld [vmem:[#allocation2 + $0x70] sm:$0xff]
    %v99 = vld [vmem:[#allocation2 + $0x78] sm:$0xff]
    %v100 = vld [vmem:[#allocation2 + $0x80] sm:$0xff]
    %v101 = vld [vmem:[#allocation2 + $0x88] sm:$0xff]
    %v102 = vld [vmem:[#allocation2 + $0x90] sm:$0xff]
    %v103 = vld [vmem:[#allocation2 + $0x98] sm:$0xff]
    %v104 = vld [vmem:[#allocation2 + $0xa0] sm:$0xff]
    %v105 = vld [vmem:[#allocation2 + $0xa8] sm:$0xff]
    %v106 = vld [vmem:[#allocation2 + $0xb0] sm:$0xff]
    %v107 = vld [vmem:[#allocation2 + $0xb8] sm:$0xff]
    %v108 = vld [vmem:[#allocation2 + $0xc0] sm:$0x33]
    %v109 = vld [vmem:[#allocation2 + $0xc8] sm:$0x33]
    %v110 = vld [vmem:[#allocation4] sm:$0xff]
    %v111 = vld [vmem:[#allocation4 + $0x8] sm:$0xff]
    %v112 = vld [vmem:[#allocation4 + $0x10] sm:$0xff]
    %v113 = vld [vmem:[#allocation4 + $0x18] sm:$0xff]
    %v114 = vld [vmem:[#allocation4 + $0x20] sm:$0xff]
    %v115 = vld [vmem:[#allocation4 + $0x28] sm:$0xff]
    %v116 = vld [vmem:[#allocation4 + $0x30] sm:$0xff]
    %v117 = vld [vmem:[#allocation4 + $0x38] sm:$0xff]
    %v118 = vld [vmem:[#allocation4 + $0x40] sm:$0xff]
    %v119 = vld [vmem:[#allocation4 + $0x48] sm:$0xff]
    %v120 = vld [vmem:[#allocation4 + $0x50] sm:$0xff]
    %v121 = vld [vmem:[#allocation4 + $0x58] sm:$0xff]
    %v122 = vld [vmem:[#allocation4 + $0x60] sm:$0xff]
    %v123 = vld [vmem:[#allocation4 + $0x68] sm:$0xff]
    %v124 = vld [vmem:[#allocation4 + $0x70] sm:$0xff]
    %v125 = vld [vmem:[#allocation4 + $0x78] sm:$0xff]
    %v126 = vld [vmem:[#allocation4 + $0x80] sm:$0xff]
    %v127 = vld [vmem:[#allocation4 + $0x88] sm:$0xff]
    %v128 = vld [vmem:[#allocation4 + $0x90] sm:$0xff]
    %v129 = vld [vmem:[#allocation4 + $0x98] sm:$0xff]
    %v130 = vld [vmem:[#allocation4 + $0xa0] sm:$0xff]
    %v131 = vld [vmem:[#allocation4 + $0xa8] sm:$0xff]
    %v132 = vld [vmem:[#allocation4 + $0xb0] sm:$0xff]
    %v133 = vld [vmem:[#allocation4 + $0xb8] sm:$0xff]
    %v134 = vld [vmem:[#allocation4 + $0xc0] sm:$0x33]
    %v135 = vld [vmem:[#allocation4 + $0xc8] sm:$0x33]
    %v162 = vunpack.c.l.b16 %v110
    %v163 = vunpack.c.h.b16 %v110
    %v164 = vunpack.c.l.b16 %v111
    %v165 = vunpack.c.h.b16 %v111
    %v166 = vunpack.c.l.b16 %v112
    %v167 = vunpack.c.h.b16 %v112
    %v168 = vunpack.c.l.b16 %v113
    %v169 = vunpack.c.h.b16 %v113
    %v170 = vunpack.c.l.b16 %v114
    %v171 = vunpack.c.h.b16 %v114
    %v172 = vunpack.c.l.b16 %v115
    %v173 = vunpack.c.h.b16 %v115
    %v174 = vunpack.c.l.b16 %v116
    %v175 = vunpack.c.h.b16 %v116
    %v176 = vunpack.c.l.b16 %v117
    %v177 = vunpack.c.h.b16 %v117
    %v178 = vunpack.c.l.b16 %v118
    %v179 = vunpack.c.h.b16 %v118
    %v180 = vunpack.c.l.b16 %v119
    %v181 = vunpack.c.h.b16 %v119
    %v182 = vunpack.c.l.b16 %v120
    %v183 = vunpack.c.h.b16 %v120
    %v184 = vunpack.c.l.b16 %v121
    %v185 = vunpack.c.h.b16 %v121
    %v186 = vunpack.c.l.b16 %v122
    %v187 = vunpack.c.h.b16 %v122
    %v188 = vunpack.c.l.b16 %v123
    %v189 = vunpack.c.h.b16 %v123
    %v190 = vunpack.c.l.b16 %v124
    %v191 = vunpack.c.h.b16 %v124
    %v192 = vunpack.c.l.b16 %v125
    %v193 = vunpack.c.h.b16 %v125
    %v194 = vunpack.c.l.b16 %v126
    %v195 = vunpack.c.h.b16 %v126
    %v196 = vunpack.c.l.b16 %v127
    %v197 = vunpack.c.h.b16 %v127
    %v198 = vunpack.c.l.b16 %v128
    %v199 = vunpack.c.h.b16 %v128
    %v200 = vunpack.c.l.b16 %v129
    %v201 = vunpack.c.h.b16 %v129
    %v202 = vunpack.c.l.b16 %v130
    %v203 = vunpack.c.h.b16 %v130
    %v204 = vunpack.c.l.b16 %v131
    %v205 = vunpack.c.h.b16 %v131
    %v206 = vunpack.c.l.b16 %v132
    %v207 = vunpack.c.h.b16 %v132
    %v208 = vunpack.c.l.b16 %v133
    %v209 = vunpack.c.h.b16 %v133
    %v210 = vunpack.c.l.b16 %v134
    %v211 = vunpack.c.h.b16 %v134
    %v212 = vunpack.c.l.b16 %v135
    %v213 = vunpack.c.h.b16 %v135
    %v214 = vpack.c.b16 %v166, %v162
    %v215 = vpack.c.b16 %v167, %v163
    %v216 = vpack.c.b16 %v168, %v164
    %v217 = vpack.c.b16 %v169, %v165
    %v218 = vpack.c.b16 %v174, %v170
    %v219 = vpack.c.b16 %v175, %v171
    %v220 = vpack.c.b16 %v176, %v172
    %v221 = vpack.c.b16 %v177, %v173
    %v222 = vpack.c.b16 %v182, %v178
    %v223 = vpack.c.b16 %v183, %v179
    %v224 = vpack.c.b16 %v184, %v180
    %v225 = vpack.c.b16 %v185, %v181
    %v226 = vpack.c.b16 %v190, %v186
    %v227 = vpack.c.b16 %v191, %v187
    %v228 = vpack.c.b16 %v192, %v188
    %v229 = vpack.c.b16 %v193, %v189
    %v230 = vpack.c.b16 %v198, %v194
    %v231 = vpack.c.b16 %v199, %v195
    %v232 = vpack.c.b16 %v200, %v196
    %v233 = vpack.c.b16 %v201, %v197
    %v234 = vpack.c.b16 %v206, %v202
    %v235 = vpack.c.b16 %v207, %v203
    %v236 = vpack.c.b16 %v208, %v204
    %v237 = vpack.c.b16 %v209, %v205
    %v238 = vpack.c.b16 %v210, %v210
    %v239 = vpack.c.b16 %v211, %v211
    %v240 = vpack.c.b16 %v212, %v212
    %v241 = vpack.c.b16 %v213, %v213
    %vm266 = vcmask 818176
    %v268 = vsel %vm266, %v83, 0
    %vm270 = vcmask 1041408
    %v272 = vsel %vm270, %v238, 0
    %v275 = vsel %vm270, %v239, 0
    %v278 = vsel %vm270, %v240, 0
    %v281 = vsel %vm270, %v241, 0
    %283 = vmatprep.subr.bf16.mxu0 %v215
    %284 = vmatpush1.bf16.msra.mxu0 %v214
    %285 = vmatprep.subr.bf16.mxu0 %v219
    %286 = vmatpush1.bf16.msra.mxu0 %v218
    %287 = vmatprep.subr.bf16.mxu0 %v223
    %288 = vmatpush1.bf16.msra.mxu0 %v222
    %289 = vmatprep.subr.bf16.mxu0 %v227
    %290 = vmatpush1.bf16.msra.mxu0 %v226
    %291 = vmatprep.subr.bf16.mxu0 %v231
    %292 = vmatpush1.bf16.msra.mxu0 %v230
    %293 = vmatprep.subr.bf16.mxu0 %v235
    %294 = vmatpush1.bf16.msra.mxu0 %v234
    %295 = vmatprep.subr.bf16.mxu0 %v275
    %296 = vmatpush1.bf16.msra.mxu0 %v272
    %297 = vmatprep.subr.bf16.mxu0 0
    %298 = vmatpush1.bf16.msra.mxu0 0
    %299 = vmatprep.subr.bf16.mxu0 0
    %300 = vmatpush1.bf16.msra.mxu0 0
    %301 = vmatprep.subr.bf16.mxu0 0
    %302 = vmatpush1.bf16.msra.mxu0 0
    %303 = vmatprep.subr.bf16.mxu0 0
    %304 = vmatpush1.bf16.msra.mxu0 0
    %305 = vmatprep.subr.bf16.mxu0 0
    %306 = vmatpush1.bf16.msra.mxu0 0
    %307 = vmatprep.subr.bf16.mxu0 0
    %308 = vmatpush1.bf16.msra.mxu0 0
    %309 = vmatprep.subr.bf16.mxu0 0
    %310 = vmatpush1.bf16.msra.mxu0 0
    %311 = vmatprep.subr.bf16.mxu0 0
    %312 = vmatpush1.bf16.msra.mxu0 0
    %313 = vmatprep.subr.bf16.mxu0 0
    %314 = vmatpush1.bf16.msra.mxu0 0
    %315 = vmatprep.mubr.bf16.mxu0 0
    %316 = vmatmul.mubr.bf16.gmra.mrb[0].mxu0 %v268
    %v317 = vpop.f32.mrb[0].mxu0
    %v318 = vadd.f32 0.0, %v317
    %v319 = vpop.f32.mrb[0].mxu0
    %v320 = vadd.f32 0.0, %v319
    %v321 = vpop.f32.mrb[0].mxu0
    %v322 = vpop.f32.mrb[0].mxu0
    %323 = vdwg.mxu0
    %324 = vmatprep.subr.bf16.mxu0 %v217
    %325 = vmatpush1.bf16.msra.mxu0 %v216
    %326 = vmatprep.subr.bf16.mxu0 %v221
    %327 = vmatpush1.bf16.msra.mxu0 %v220
    %328 = vmatprep.subr.bf16.mxu0 %v225
    %329 = vmatpush1.bf16.msra.mxu0 %v224
    %330 = vmatprep.subr.bf16.mxu0 %v229
    %331 = vmatpush1.bf16.msra.mxu0 %v228
    %332 = vmatprep.subr.bf16.mxu0 %v233
    %333 = vmatpush1.bf16.msra.mxu0 %v232
    %334 = vmatprep.subr.bf16.mxu0 %v237
    %335 = vmatpush1.bf16.msra.mxu0 %v236
    %336 = vmatprep.subr.bf16.mxu0 %v281
    %337 = vmatpush1.bf16.msra.mxu0 %v278
    %338 = vmatprep.subr.bf16.mxu0 0
    %339 = vmatpush1.bf16.msra.mxu0 0
    %340 = vmatprep.subr.bf16.mxu0 0
    %341 = vmatpush1.bf16.msra.mxu0 0
    %342 = vmatprep.subr.bf16.mxu0 0
    %343 = vmatpush1.bf16.msra.mxu0 0
    %344 = vmatprep.subr.bf16.mxu0 0
    %345 = vmatpush1.bf16.msra.mxu0 0
    %346 = vmatprep.subr.bf16.mxu0 0
    %347 = vmatpush1.bf16.msra.mxu0 0
    %348 = vmatprep.subr.bf16.mxu0 0
    %349 = vmatpush1.bf16.msra.mxu0 0
    %350 = vmatprep.subr.bf16.mxu0 0
    %351 = vmatpush1.bf16.msra.mxu0 0
    %352 = vmatprep.subr.bf16.mxu0 0
    %353 = vmatpush1.bf16.msra.mxu0 0
    %354 = vmatprep.subr.bf16.mxu0 0
    %355 = vmatpush1.bf16.msra.mxu0 0
    %356 = vmatprep.mubr.bf16.mxu0 0
    %357 = vmatmul.mubr.bf16.gmra.mrb[0].mxu0 %v268
    %v358 = vpop.f32.mrb[0].mxu0
    %v359 = vadd.f32 0.0, %v358
    %v360 = vpop.f32.mrb[0].mxu0
    %v361 = vadd.f32 0.0, %v360
    %v362 = vpop.f32.mrb[0].mxu0
    %v363 = vpop.f32.mrb[0].mxu0
    %364 = vdwg.mxu0
    %v391 = vunpack.c.l.b16 %v84
    %v392 = vunpack.c.h.b16 %v84
    %v393 = vunpack.c.l.b16 %v85
    %v394 = vunpack.c.h.b16 %v85
    %v395 = vunpack.c.l.b16 %v86
    %v396 = vunpack.c.h.b16 %v86
    %v397 = vunpack.c.l.b16 %v87
    %v398 = vunpack.c.h.b16 %v87
    %v399 = vunpack.c.l.b16 %v88
    %v400 = vunpack.c.h.b16 %v88
    %v401 = vunpack.c.l.b16 %v89
    %v402 = vunpack.c.h.b16 %v89
    %v403 = vunpack.c.l.b16 %v90
    %v404 = vunpack.c.h.b16 %v90
    %v405 = vunpack.c.l.b16 %v91
    %v406 = vunpack.c.h.b16 %v91
    %v407 = vunpack.c.l.b16 %v92
    %v408 = vunpack.c.h.b16 %v92
    %v409 = vunpack.c.l.b16 %v93
    %v410 = vunpack.c.h.b16 %v93
    %v411 = vunpack.c.l.b16 %v94
    %v412 = vunpack.c.h.b16 %v94
    %v413 = vunpack.c.l.b16 %v95
    %v414 = vunpack.c.h.b16 %v95
    %v415 = vunpack.c.l.b16 %v96
    %v416 = vunpack.c.h.b16 %v96
    %v417 = vunpack.c.l.b16 %v97
    %v418 = vunpack.c.h.b16 %v97
    %v419 = vunpack.c.l.b16 %v98
    %v420 = vunpack.c.h.b16 %v98
    %v421 = vunpack.c.l.b16 %v99
    %v422 = vunpack.c.h.b16 %v99
    %v423 = vunpack.c.l.b16 %v100
    %v424 = vunpack.c.h.b16 %v100
    %v425 = vunpack.c.l.b16 %v101
    %v426 = vunpack.c.h.b16 %v101
    %v427 = vunpack.c.l.b16 %v102
    %v428 = vunpack.c.h.b16 %v102
    %v429 = vunpack.c.l.b16 %v103
    %v430 = vunpack.c.h.b16 %v103
    %v431 = vunpack.c.l.b16 %v104
    %v432 = vunpack.c.h.b16 %v104
    %v433 = vunpack.c.l.b16 %v105
    %v434 = vunpack.c.h.b16 %v105
    %v435 = vunpack.c.l.b16 %v106
    %v436 = vunpack.c.h.b16 %v106
    %v437 = vunpack.c.l.b16 %v107
    %v438 = vunpack.c.h.b16 %v107
    %v439 = vunpack.c.l.b16 %v108
    %v440 = vunpack.c.h.b16 %v108
    %v441 = vunpack.c.l.b16 %v109
    %v442 = vunpack.c.h.b16 %v109
    %v443 = vpack.c.b16 %v395, %v391
    %v444 = vpack.c.b16 %v396, %v392
    %v445 = vpack.c.b16 %v397, %v393
    %v446 = vpack.c.b16 %v398, %v394
    %v447 = vpack.c.b16 %v403, %v399
    %v448 = vpack.c.b16 %v404, %v400
    %v449 = vpack.c.b16 %v405, %v401
    %v450 = vpack.c.b16 %v406, %v402
    %v451 = vpack.c.b16 %v411, %v407
    %v452 = vpack.c.b16 %v412, %v408
    %v453 = vpack.c.b16 %v413, %v409
    %v454 = vpack.c.b16 %v414, %v410
    %v455 = vpack.c.b16 %v419, %v415
    %v456 = vpack.c.b16 %v420, %v416
    %v457 = vpack.c.b16 %v421, %v417
    %v458 = vpack.c.b16 %v422, %v418
    %v459 = vpack.c.b16 %v427, %v423
    %v460 = vpack.c.b16 %v428, %v424
    %v461 = vpack.c.b16 %v429, %v425
    %v462 = vpack.c.b16 %v430, %v426
    %v463 = vpack.c.b16 %v435, %v431
    %v464 = vpack.c.b16 %v436, %v432
    %v465 = vpack.c.b16 %v437, %v433
    %v466 = vpack.c.b16 %v438, %v434
    %v467 = vpack.c.b16 %v439, %v439
    %v468 = vpack.c.b16 %v440, %v440
    %v469 = vpack.c.b16 %v441, %v441
    %v470 = vpack.c.b16 %v442, %v442
    %v496 = vsel %vm266, %v81, 0
    %v499 = vsel %vm270, %v467, 0
    %v502 = vsel %vm270, %v468, 0
    %v505 = vsel %vm270, %v469, 0
    %v508 = vsel %vm270, %v470, 0
    %510 = vmatprep.subr.bf16.mxu0 %v444
    %511 = vmatpush1.bf16.msra.mxu0 %v443
    %512 = vmatprep.subr.bf16.mxu0 %v448
    %513 = vmatpush1.bf16.msra.mxu0 %v447
    %514 = vmatprep.subr.bf16.mxu0 %v452
    %515 = vmatpush1.bf16.msra.mxu0 %v451
    %516 = vmatprep.subr.bf16.mxu0 %v456
    %517 = vmatpush1.bf16.msra.mxu0 %v455
    %518 = vmatprep.subr.bf16.mxu0 %v460
    %519 = vmatpush1.bf16.msra.mxu0 %v459
    %520 = vmatprep.subr.bf16.mxu0 %v464
    %521 = vmatpush1.bf16.msra.mxu0 %v463
    %522 = vmatprep.subr.bf16.mxu0 %v502
    %523 = vmatpush1.bf16.msra.mxu0 %v499
    %524 = vmatprep.subr.bf16.mxu0 0
    %525 = vmatpush1.bf16.msra.mxu0 0
    %526 = vmatprep.subr.bf16.mxu0 0
    %527 = vmatpush1.bf16.msra.mxu0 0
    %528 = vmatprep.subr.bf16.mxu0 0
    %529 = vmatpush1.bf16.msra.mxu0 0
    %530 = vmatprep.subr.bf16.mxu0 0
    %531 = vmatpush1.bf16.msra.mxu0 0
    %532 = vmatprep.subr.bf16.mxu0 0
    %533 = vmatpush1.bf16.msra.mxu0 0
    %534 = vmatprep.subr.bf16.mxu0 0
    %535 = vmatpush1.bf16.msra.mxu0 0
    %536 = vmatprep.subr.bf16.mxu0 0
    %537 = vmatpush1.bf16.msra.mxu0 0
    %538 = vmatprep.subr.bf16.mxu0 0
    %539 = vmatpush1.bf16.msra.mxu0 0
    %540 = vmatprep.subr.bf16.mxu0 0
    %541 = vmatpush1.bf16.msra.mxu0 0
    %542 = vmatprep.mubr.bf16.mxu0 0
    %543 = vmatmul.mubr.bf16.gmra.mrb[0].mxu0 %v496
    %v544 = vpop.f32.mrb[0].mxu0
    %v545 = vadd.f32 %v318, %v544
    %v546 = vpop.f32.mrb[0].mxu0
    %v547 = vadd.f32 %v320, %v546
    %v548 = vpop.f32.mrb[0].mxu0
    %v549 = vpop.f32.mrb[0].mxu0
    %550 = vdwg.mxu0
    %551 = vmatprep.subr.bf16.mxu0 %v446
    %552 = vmatpush1.bf16.msra.mxu0 %v445
    %553 = vmatprep.subr.bf16.mxu0 %v450
    %554 = vmatpush1.bf16.msra.mxu0 %v449
    %555 = vmatprep.subr.bf16.mxu0 %v454
    %556 = vmatpush1.bf16.msra.mxu0 %v453
    %557 = vmatprep.subr.bf16.mxu0 %v458
    %558 = vmatpush1.bf16.msra.mxu0 %v457
    %559 = vmatprep.subr.bf16.mxu0 %v462
    %560 = vmatpush1.bf16.msra.mxu0 %v461
    %561 = vmatprep.subr.bf16.mxu0 %v466
    %562 = vmatpush1.bf16.msra.mxu0 %v465
    %563 = vmatprep.subr.bf16.mxu0 %v508
    %564 = vmatpush1.bf16.msra.mxu0 %v505
    %565 = vmatprep.subr.bf16.mxu0 0
    %566 = vmatpush1.bf16.msra.mxu0 0
    %567 = vmatprep.subr.bf16.mxu0 0
    %568 = vmatpush1.bf16.msra.mxu0 0
    %569 = vmatprep.subr.bf16.mxu0 0
    %570 = vmatpush1.bf16.msra.mxu0 0
    %571 = vmatprep.subr.bf16.mxu0 0
    %572 = vmatpush1.bf16.msra.mxu0 0
    %573 = vmatprep.subr.bf16.mxu0 0
    %574 = vmatpush1.bf16.msra.mxu0 0
    %575 = vmatprep.subr.bf16.mxu0 0
    %576 = vmatpush1.bf16.msra.mxu0 0
    %577 = vmatprep.subr.bf16.mxu0 0
    %578 = vmatpush1.bf16.msra.mxu0 0
    %579 = vmatprep.subr.bf16.mxu0 0
    %580 = vmatpush1.bf16.msra.mxu0 0
    %581 = vmatprep.subr.bf16.mxu0 0
    %582 = vmatpush1.bf16.msra.mxu0 0
    %583 = vmatprep.mubr.bf16.mxu0 0
    %584 = vmatmul.mubr.bf16.gmra.mrb[0].mxu0 %v496
    %v585 = vpop.f32.mrb[0].mxu0
    %v586 = vadd.f32 %v359, %v585
    %v587 = vpop.f32.mrb[0].mxu0
    %v588 = vadd.f32 %v361, %v587
    %v589 = vpop.f32.mrb[0].mxu0
    %v590 = vpop.f32.mrb[0].mxu0
    %591 = vdwg.mxu0
    %v592 = vld [vmem:[%s4] sm:$0xf]
    %v594 = vlaneseq
    %v595 = vshrl.u32 %v594, 7
    %v596 = vsub.s32 0, %v595
    %v597 = vrot.slane %v592, %v596
    %v598 = vlaneseq
    %v599 = vshrl.u32 %v598, 7
    %v600 = vsub.s32 1, %v599
    %v601 = vrot.slane %v592, %v600
    %v602 = vlaneseq
    %v603 = vshrl.u32 %v602, 7
    %v604 = vsub.s32 2, %v603
    %v605 = vrot.slane %v592, %v604
    %v606 = vlaneseq
    %v607 = vshrl.u32 %v606, 7
    %v608 = vsub.s32 3, %v607
    %v609 = vrot.slane %v592, %v608
    %v614 = vadd.f32 %v545, %v597
    %v615 = vadd.f32 %v547, %v601
    %v616 = vadd.f32 %v586, %v605
    %v617 = vadd.f32 %v588, %v609
    %v618 = vmax.f32 %v614, 0.0
    %v619 = vmax.f32 %v615, 0.0
    %v620 = vmax.f32 %v616, 0.0
    %v621 = vmax.f32 %v617, 0.0
    %v622 = vpack.c.bf16 %v618, %v618
    %v623 = vpack.c.bf16 %v619, %v619
    %v624 = vpack.c.bf16 %v620, %v620
    %v625 = vpack.c.bf16 %v621, %v621
    %v626 = vld [vmem:[#allocation6] sm:$0xf]
    %v627 = vld [vmem:[#allocation6 + $0x4] sm:$0xf]
    %v628 = vld [vmem:[#allocation6 + $0x8] sm:$0xf]
    %v629 = vld [vmem:[#allocation6 + $0xc] sm:$0xf]
    %v630 = vld [vmem:[#allocation6 + $0x10] sm:$0xf]
    %v631 = vld [vmem:[#allocation6 + $0x14] sm:$0xf]
    %v632 = vld [vmem:[#allocation6 + $0x18] sm:$0xf]
    %v633 = vld [vmem:[#allocation6 + $0x1c] sm:$0xf]
    %v634 = vld [vmem:[#allocation6 + $0x20] sm:$0xf]
    %v635 = vld [vmem:[#allocation6 + $0x24] sm:$0xf]
    %v636 = vld [vmem:[#allocation6 + $0x28] sm:$0xf]
    %v637 = vld [vmem:[#allocation6 + $0x2c] sm:$0xf]
    %v638 = vld [vmem:[#allocation6 + $0x30] sm:$0xf]
    %v639 = vld [vmem:[#allocation6 + $0x34] sm:$0xf]
    %v640 = vld [vmem:[#allocation6 + $0x38] sm:$0xf]
    %v641 = vld [vmem:[#allocation6 + $0x3c] sm:$0xf]
    %v642 = vld [vmem:[#allocation6 + $0x40] sm:$0xf]
    %v643 = vld [vmem:[#allocation6 + $0x44] sm:$0xf]
    %v644 = vld [vmem:[#allocation6 + $0x48] sm:$0xf]
    %v645 = vld [vmem:[#allocation6 + $0x4c] sm:$0xf]
    %v646 = vld [vmem:[#allocation6 + $0x50] sm:$0xf]
    %v647 = vld [vmem:[#allocation6 + $0x54] sm:$0xf]
    %v648 = vld [vmem:[#allocation6 + $0x58] sm:$0xf]
    %v649 = vld [vmem:[#allocation6 + $0x5c] sm:$0xf]
    %v650 = vld [vmem:[#allocation6 + $0x60] sm:$0xf]
    %v651 = vld [vmem:[#allocation6 + $0x64] sm:$0xf]
    %v652 = vld [vmem:[#allocation6 + $0x68] sm:$0xf]
    %v653 = vld [vmem:[#allocation6 + $0x6c] sm:$0xf]
    %v654 = vld [vmem:[#allocation6 + $0x70] sm:$0xf]
    %v655 = vld [vmem:[#allocation6 + $0x74] sm:$0xf]
    %v656 = vld [vmem:[#allocation6 + $0x78] sm:$0xf]
    %v657 = vld [vmem:[#allocation6 + $0x7c] sm:$0xf]
    %v658 = vld [vmem:[#allocation6 + $0x80] sm:$0xf]
    %v659 = vld [vmem:[#allocation6 + $0x84] sm:$0xf]
    %v660 = vld [vmem:[#allocation6 + $0x88] sm:$0xf]
    %v661 = vld [vmem:[#allocation6 + $0x8c] sm:$0xf]
    %v662 = vld [vmem:[#allocation6 + $0x90] sm:$0xf]
    %v663 = vld [vmem:[#allocation6 + $0x94] sm:$0xf]
    %v664 = vld [vmem:[#allocation6 + $0x98] sm:$0xf]
    %v665 = vld [vmem:[#allocation6 + $0x9c] sm:$0xf]
    %v666 = vld [vmem:[#allocation6 + $0xa0] sm:$0xf]
    %v667 = vld [vmem:[#allocation6 + $0xa4] sm:$0xf]
    %v668 = vld [vmem:[#allocation6 + $0xa8] sm:$0xf]
    %v669 = vld [vmem:[#allocation6 + $0xac] sm:$0xf]
    %v670 = vld [vmem:[#allocation6 + $0xb0] sm:$0xf]
    %v671 = vld [vmem:[#allocation6 + $0xb4] sm:$0xf]
    %v672 = vld [vmem:[#allocation6 + $0xb8] sm:$0xf]
    %v673 = vld [vmem:[#allocation6 + $0xbc] sm:$0xf]
    %v674 = vld [vmem:[#allocation6 + $0xc0] sm:$0xf]
    %v675 = vld [vmem:[#allocation6 + $0xc4] sm:$0xf]
    %v676 = vld [vmem:[#allocation6 + $0xc8] sm:$0xf]
    %v677 = vld [vmem:[#allocation6 + $0xcc] sm:$0xf]
    %v678 = vld [vmem:[#allocation6 + $0xd0] sm:$0xf]
    %v679 = vld [vmem:[#allocation6 + $0xd4] sm:$0xf]
    %v680 = vld [vmem:[#allocation6 + $0xd8] sm:$0xf]
    %v681 = vld [vmem:[#allocation6 + $0xdc] sm:$0xf]
    %v682 = vld [vmem:[#allocation6 + $0xe0] sm:$0xf]
    %v683 = vld [vmem:[#allocation6 + $0xe4] sm:$0xf]
    %v684 = vld [vmem:[#allocation6 + $0xe8] sm:$0xf]
    %v685 = vld [vmem:[#allocation6 + $0xec] sm:$0xf]
    %v686 = vld [vmem:[#allocation6 + $0xf0] sm:$0xf]
    %v687 = vld [vmem:[#allocation6 + $0xf4] sm:$0xf]
    %v688 = vld [vmem:[#allocation6 + $0xf8] sm:$0xf]
    %v689 = vld [vmem:[#allocation6 + $0xfc] sm:$0xf]
    %v690 = vld [vmem:[%s6] sm:$0x1]
    %v692 = vlaneseq
    %v693 = vshrl.u32 %v692, 7
    %v694 = vsub.s32 0, %v693
    %v695 = vrot.slane %v690, %v694
    %v761 = vunpack.c.l.b16 %v626
    %v762 = vunpack.c.l.b16 %v627
    %v763 = vunpack.c.l.b16 %v628
    %v764 = vunpack.c.l.b16 %v629
    %v765 = vunpack.c.l.b16 %v630
    %v766 = vunpack.c.l.b16 %v631
    %v767 = vunpack.c.l.b16 %v632
    %v768 = vunpack.c.l.b16 %v633
    %v769 = vunpack.c.l.b16 %v634
    %v770 = vunpack.c.l.b16 %v635
    %v771 = vunpack.c.l.b16 %v636
    %v772 = vunpack.c.l.b16 %v637
    %v773 = vunpack.c.l.b16 %v638
    %v774 = vunpack.c.l.b16 %v639
    %v775 = vunpack.c.l.b16 %v640
    %v776 = vunpack.c.l.b16 %v641
    %v777 = vunpack.c.l.b16 %v642
    %v778 = vunpack.c.l.b16 %v643
    %v779 = vunpack.c.l.b16 %v644
    %v780 = vunpack.c.l.b16 %v645
    %v781 = vunpack.c.l.b16 %v646
    %v782 = vunpack.c.l.b16 %v647
    %v783 = vunpack.c.l.b16 %v648
    %v784 = vunpack.c.l.b16 %v649
    %v785 = vunpack.c.l.b16 %v650
    %v786 = vunpack.c.l.b16 %v651
    %v787 = vunpack.c.l.b16 %v652
    %v788 = vunpack.c.l.b16 %v653
    %v789 = vunpack.c.l.b16 %v654
    %v790 = vunpack.c.l.b16 %v655
    %v791 = vunpack.c.l.b16 %v656
    %v792 = vunpack.c.l.b16 %v657
    %v793 = vunpack.c.l.b16 %v658
    %v794 = vunpack.c.l.b16 %v659
    %v795 = vunpack.c.l.b16 %v660
    %v796 = vunpack.c.l.b16 %v661
    %v797 = vunpack.c.l.b16 %v662
    %v798 = vunpack.c.l.b16 %v663
    %v799 = vunpack.c.l.b16 %v664
    %v800 = vunpack.c.l.b16 %v665
    %v801 = vunpack.c.l.b16 %v666
    %v802 = vunpack.c.l.b16 %v667
    %v803 = vunpack.c.l.b16 %v668
    %v804 = vunpack.c.l.b16 %v669
    %v805 = vunpack.c.l.b16 %v670
    %v806 = vunpack.c.l.b16 %v671
    %v807 = vunpack.c.l.b16 %v672
    %v808 = vunpack.c.l.b16 %v673
    %v809 = vunpack.c.l.b16 %v674
    %v810 = vunpack.c.l.b16 %v675
    %v811 = vunpack.c.l.b16 %v676
    %v812 = vunpack.c.l.b16 %v677
    %v813 = vunpack.c.l.b16 %v678
    %v814 = vunpack.c.l.b16 %v679
    %v815 = vunpack.c.l.b16 %v680
    %v816 = vunpack.c.l.b16 %v681
    %v817 = vunpack.c.l.b16 %v682
    %v818 = vunpack.c.l.b16 %v683
    %v819 = vunpack.c.l.b16 %v684
    %v820 = vunpack.c.l.b16 %v685
    %v821 = vunpack.c.l.b16 %v686
    %v822 = vunpack.c.l.b16 %v687
    %v823 = vunpack.c.l.b16 %v688
    %v824 = vunpack.c.l.b16 %v689
    %v825 = vpack.c.b16 %v762, %v761
    %v826 = vpack.c.b16 %v764, %v763
    %v827 = vpack.c.b16 %v766, %v765
    %v828 = vpack.c.b16 %v768, %v767
    %v829 = vpack.c.b16 %v770, %v769
    %v830 = vpack.c.b16 %v772, %v771
    %v831 = vpack.c.b16 %v774, %v773
    %v832 = vpack.c.b16 %v776, %v775
    %v833 = vpack.c.b16 %v778, %v777
    %v834 = vpack.c.b16 %v780, %v779
    %v835 = vpack.c.b16 %v782, %v781
    %v836 = vpack.c.b16 %v784, %v783
    %v837 = vpack.c.b16 %v786, %v785
    %v838 = vpack.c.b16 %v788, %v787
    %v839 = vpack.c.b16 %v790, %v789
    %v840 = vpack.c.b16 %v792, %v791
    %v841 = vpack.c.b16 %v794, %v793
    %v842 = vpack.c.b16 %v796, %v795
    %v843 = vpack.c.b16 %v798, %v797
    %v844 = vpack.c.b16 %v800, %v799
    %v845 = vpack.c.b16 %v802, %v801
    %v846 = vpack.c.b16 %v804, %v803
    %v847 = vpack.c.b16 %v806, %v805
    %v848 = vpack.c.b16 %v808, %v807
    %v849 = vpack.c.b16 %v810, %v809
    %v850 = vpack.c.b16 %v812, %v811
    %v851 = vpack.c.b16 %v814, %v813
    %v852 = vpack.c.b16 %v816, %v815
    %v853 = vpack.c.b16 %v818, %v817
    %v854 = vpack.c.b16 %v820, %v819
    %v855 = vpack.c.b16 %v822, %v821
    %v856 = vpack.c.b16 %v824, %v823
    %889 = vmatprep.subr.bf16.mxu0 0
    %890 = vmatpush1.bf16.msra.mxu0 %v825
    %891 = vmatprep.subr.bf16.mxu0 0
    %892 = vmatpush1.bf16.msra.mxu0 %v826
    %893 = vmatprep.subr.bf16.mxu0 0
    %894 = vmatpush1.bf16.msra.mxu0 %v827
    %895 = vmatprep.subr.bf16.mxu0 0
    %896 = vmatpush1.bf16.msra.mxu0 %v828
    %897 = vmatprep.subr.bf16.mxu0 0
    %898 = vmatpush1.bf16.msra.mxu0 %v829
    %899 = vmatprep.subr.bf16.mxu0 0
    %900 = vmatpush1.bf16.msra.mxu0 %v830
    %901 = vmatprep.subr.bf16.mxu0 0
    %902 = vmatpush1.bf16.msra.mxu0 %v831
    %903 = vmatprep.subr.bf16.mxu0 0
    %904 = vmatpush1.bf16.msra.mxu0 %v832
    %905 = vmatprep.subr.bf16.mxu0 0
    %906 = vmatpush1.bf16.msra.mxu0 %v833
    %907 = vmatprep.subr.bf16.mxu0 0
    %908 = vmatpush1.bf16.msra.mxu0 %v834
    %909 = vmatprep.subr.bf16.mxu0 0
    %910 = vmatpush1.bf16.msra.mxu0 %v835
    %911 = vmatprep.subr.bf16.mxu0 0
    %912 = vmatpush1.bf16.msra.mxu0 %v836
    %913 = vmatprep.subr.bf16.mxu0 0
    %914 = vmatpush1.bf16.msra.mxu0 %v837
    %915 = vmatprep.subr.bf16.mxu0 0
    %916 = vmatpush1.bf16.msra.mxu0 %v838
    %917 = vmatprep.subr.bf16.mxu0 0
    %918 = vmatpush1.bf16.msra.mxu0 %v839
    %919 = vmatprep.subr.bf16.mxu0 0
    %920 = vmatpush1.bf16.msra.mxu0 %v840
    %921 = vmatprep.mubr.bf16.mxu0 %v623
    %922 = vmatmul.mubr.bf16.gmra.mrb[0].mxu0 %v622
    %v923 = vpop.f32.mrb[0].mxu0
    %v924 = vadd.f32 %v695, %v923
    %v925 = vpop.f32.mrb[0].mxu0
    %v926 = vpop.f32.mrb[0].mxu0
    %v927 = vpop.f32.mrb[0].mxu0
    %928 = vdwg.mxu0
    %929 = vmatprep.subr.bf16.mxu0 0
    %930 = vmatpush1.bf16.msra.mxu0 %v841
    %931 = vmatprep.subr.bf16.mxu0 0
    %932 = vmatpush1.bf16.msra.mxu0 %v842
    %933 = vmatprep.subr.bf16.mxu0 0
    %934 = vmatpush1.bf16.msra.mxu0 %v843
    %935 = vmatprep.subr.bf16.mxu0 0
    %936 = vmatpush1.bf16.msra.mxu0 %v844
    %937 = vmatprep.subr.bf16.mxu0 0
    %938 = vmatpush1.bf16.msra.mxu0 %v845
    %939 = vmatprep.subr.bf16.mxu0 0
    %940 = vmatpush1.bf16.msra.mxu0 %v846
    %941 = vmatprep.subr.bf16.mxu0 0
    %942 = vmatpush1.bf16.msra.mxu0 %v847
    %943 = vmatprep.subr.bf16.mxu0 0
    %944 = vmatpush1.bf16.msra.mxu0 %v848
    %945 = vmatprep.subr.bf16.mxu0 0
    %946 = vmatpush1.bf16.msra.mxu0 %v849
    %947 = vmatprep.subr.bf16.mxu0 0
    %948 = vmatpush1.bf16.msra.mxu0 %v850
    %949 = vmatprep.subr.bf16.mxu0 0
    %950 = vmatpush1.bf16.msra.mxu0 %v851
    %951 = vmatprep.subr.bf16.mxu0 0
    %952 = vmatpush1.bf16.msra.mxu0 %v852
    %953 = vmatprep.subr.bf16.mxu0 0
    %954 = vmatpush1.bf16.msra.mxu0 %v853
    %955 = vmatprep.subr.bf16.mxu0 0
    %956 = vmatpush1.bf16.msra.mxu0 %v854
    %957 = vmatprep.subr.bf16.mxu0 0
    %958 = vmatpush1.bf16.msra.mxu0 %v855
    %959 = vmatprep.subr.bf16.mxu0 0
    %960 = vmatpush1.bf16.msra.mxu0 %v856
    %961 = vmatprep.mubr.bf16.mxu0 %v625
    %962 = vmatmul.mubr.bf16.gmra.mrb[0].mxu0 %v624
    %v963 = vpop.f32.mrb[0].mxu0
    %v964 = vadd.f32 %v924, %v963
    %v965 = vpop.f32.mrb[0].mxu0
    %v966 = vpop.f32.mrb[0].mxu0
    %v967 = vpop.f32.mrb[0].mxu0
    %968 = vdwg.mxu0
    %v969 = vmax.f32 %v964, 0.0
    %v970 = vpack.c.bf16 %v969, %v969
    %v971 = vld [vmem:[%s7] sm:$0xf]
    %v972 = vld [vmem:[%s7 + $0x4] sm:$0xf]
    %v973 = vld [vmem:[%s7 + $0x8] sm:$0xf]
    %v974 = vld [vmem:[%s7 + $0xc] sm:$0xf]
    %v975 = vld [vmem:[%s7 + $0x10] sm:$0xf]
    %v976 = vld [vmem:[%s7 + $0x14] sm:$0xf]
    %v977 = vld [vmem:[%s7 + $0x18] sm:$0xf]
    %v978 = vld [vmem:[%s7 + $0x1c] sm:$0xf]
    %v979 = vld [vmem:[%s7 + $0x20] sm:$0xf]
    %v980 = vld [vmem:[%s7 + $0x24] sm:$0xf]
    %v981 = vld [vmem:[%s7 + $0x28] sm:$0xf]
    %v982 = vld [vmem:[%s7 + $0x2c] sm:$0xf]
    %v983 = vld [vmem:[%s7 + $0x30] sm:$0xf]
    %v984 = vld [vmem:[%s7 + $0x34] sm:$0xf]
    %v985 = vld [vmem:[%s7 + $0x38] sm:$0xf]
    %v986 = vld [vmem:[%s7 + $0x3c] sm:$0xf]
    %v987 = vld [vmem:[%s8] sm:$0x1]
    %v989 = vlaneseq
    %v990 = vshrl.u32 %v989, 7
    %v991 = vsub.s32 0, %v990
    %v992 = vrot.slane %v987, %v991
    %v1010 = vunpack.c.l.b16 %v971
    %v1011 = vunpack.c.l.b16 %v972
    %v1012 = vunpack.c.l.b16 %v973
    %v1013 = vunpack.c.l.b16 %v974
    %v1014 = vunpack.c.l.b16 %v975
    %v1015 = vunpack.c.l.b16 %v976
    %v1016 = vunpack.c.l.b16 %v977
    %v1017 = vunpack.c.l.b16 %v978
    %v1018 = vunpack.c.l.b16 %v979
    %v1019 = vunpack.c.l.b16 %v980
    %v1020 = vunpack.c.l.b16 %v981
    %v1021 = vunpack.c.l.b16 %v982
    %v1022 = vunpack.c.l.b16 %v983
    %v1023 = vunpack.c.l.b16 %v984
    %v1024 = vunpack.c.l.b16 %v985
    %v1025 = vunpack.c.l.b16 %v986
    %v1026 = vpack.c.b16 %v1011, %v1010
    %v1027 = vpack.c.b16 %v1013, %v1012
    %v1028 = vpack.c.b16 %v1015, %v1014
    %v1029 = vpack.c.b16 %v1017, %v1016
    %v1030 = vpack.c.b16 %v1019, %v1018
    %v1031 = vpack.c.b16 %v1021, %v1020
    %v1032 = vpack.c.b16 %v1023, %v1022
    %v1033 = vpack.c.b16 %v1025, %v1024
    %1042 = vmatprep.subr.bf16.mxu0 0
    %1043 = vmatpush1.bf16.msra.mxu0 %v1026
    %1044 = vmatprep.subr.bf16.mxu0 0
    %1045 = vmatpush1.bf16.msra.mxu0 %v1027
    %1046 = vmatprep.subr.bf16.mxu0 0
    %1047 = vmatpush1.bf16.msra.mxu0 %v1028
    %1048 = vmatprep.subr.bf16.mxu0 0
    %1049 = vmatpush1.bf16.msra.mxu0 %v1029
    %1050 = vmatprep.subr.bf16.mxu0 0
    %1051 = vmatpush1.bf16.msra.mxu0 %v1030
    %1052 = vmatprep.subr.bf16.mxu0 0
    %1053 = vmatpush1.bf16.msra.mxu0 %v1031
    %1054 = vmatprep.subr.bf16.mxu0 0
    %1055 = vmatpush1.bf16.msra.mxu0 %v1032
    %1056 = vmatprep.subr.bf16.mxu0 0
    %1057 = vmatpush1.bf16.msra.mxu0 %v1033
    %1058 = vmatprep.subr.bf16.mxu0 0
    %1059 = vmatpush1.bf16.msra.mxu0 0
    %1060 = vmatprep.subr.bf16.mxu0 0
    %1061 = vmatpush1.bf16.msra.mxu0 0
    %1062 = vmatprep.subr.bf16.mxu0 0
    %1063 = vmatpush1.bf16.msra.mxu0 0
    %1064 = vmatprep.subr.bf16.mxu0 0
    %1065 = vmatpush1.bf16.msra.mxu0 0
    %1066 = vmatprep.subr.bf16.mxu0 0
    %1067 = vmatpush1.bf16.msra.mxu0 0
    %1068 = vmatprep.subr.bf16.mxu0 0
    %1069 = vmatpush1.bf16.msra.mxu0 0
    %1070 = vmatprep.subr.bf16.mxu0 0
    %1071 = vmatpush1.bf16.msra.mxu0 0
    %1072 = vmatprep.subr.bf16.mxu0 0
    %1073 = vmatpush1.bf16.msra.mxu0 0
    %1074 = vmatprep.mubr.bf16.mxu0 0
    %1075 = vmatmul.mubr.bf16.gmra.mrb[0].mxu0 %v970
    %v1076 = vpop.f32.mrb[0].mxu0
    %v1077 = vadd.f32 %v992, %v1076
    %v1078 = vpop.f32.mrb[0].mxu0
    %v1079 = vpop.f32.mrb[0].mxu0
    %v1080 = vpop.f32.mrb[0].mxu0
    %1081 = vdwg.mxu0
    %v1082 = vmax.f32 %v1077, 0.0
    %v1083 = vpack.c.bf16 %v1082, %v1082
    %v1084 = vld [vmem:[%s9] sm:$0xf]
    %v1085 = vld [vmem:[%s9 + $0x4] sm:$0xf]
    %v1086 = vld [vmem:[%s9 + $0x8] sm:$0xf]
    %v1087 = vld [vmem:[%s9 + $0xc] sm:$0xf]
    %v1088 = vld [vmem:[%s9 + $0x10] sm:$0xf]
    %v1089 = vld [vmem:[%s9 + $0x14] sm:$0xf]
    %v1090 = vld [vmem:[%s9 + $0x18] sm:$0xf]
    %v1091 = vld [vmem:[%s9 + $0x1c] sm:$0xf]
    %v1092 = vld [vmem:[%s9 + $0x20] sm:$0xf]
    %v1093 = vld [vmem:[%s9 + $0x24] sm:$0xf]
    %v1094 = vld [vmem:[%s9 + $0x28] sm:$0xf]
    %v1095 = vld [vmem:[%s9 + $0x2c] sm:$0xf]
    %v1096 = vld [vmem:[%s9 + $0x30] sm:$0xf]
    %v1097 = vld [vmem:[%s9 + $0x34] sm:$0xf]
    %v1098 = vld [vmem:[%s9 + $0x38] sm:$0xf]
    %v1099 = vld [vmem:[%s9 + $0x3c] sm:$0xf]
    %v1100 = vld [vmem:[%s10] sm:$0x1]
    %v1102 = vlaneseq
    %v1103 = vshrl.u32 %v1102, 7
    %v1104 = vsub.s32 0, %v1103
    %v1105 = vrot.slane %v1100, %v1104
    %v1123 = vunpack.c.l.b16 %v1084
    %v1124 = vunpack.c.l.b16 %v1085
    %v1125 = vunpack.c.l.b16 %v1086
    %v1126 = vunpack.c.l.b16 %v1087
    %v1127 = vunpack.c.l.b16 %v1088
    %v1128 = vunpack.c.l.b16 %v1089
    %v1129 = vunpack.c.l.b16 %v1090
    %v1130 = vunpack.c.l.b16 %v1091
    %v1131 = vunpack.c.l.b16 %v1092
    %v1132 = vunpack.c.l.b16 %v1093
    %v1133 = vunpack.c.l.b16 %v1094
    %v1134 = vunpack.c.l.b16 %v1095
    %v1135 = vunpack.c.l.b16 %v1096
    %v1136 = vunpack.c.l.b16 %v1097
    %v1137 = vunpack.c.l.b16 %v1098
    %v1138 = vunpack.c.l.b16 %v1099
    %v1139 = vpack.c.b16 %v1124, %v1123
    %v1140 = vpack.c.b16 %v1126, %v1125
    %v1141 = vpack.c.b16 %v1128, %v1127
    %v1142 = vpack.c.b16 %v1130, %v1129
    %v1143 = vpack.c.b16 %v1132, %v1131
    %v1144 = vpack.c.b16 %v1134, %v1133
    %v1145 = vpack.c.b16 %v1136, %v1135
    %v1146 = vpack.c.b16 %v1138, %v1137
    %1155 = vmatprep.subr.bf16.mxu0 0
    %1156 = vmatpush1.bf16.msra.mxu0 %v1139
    %1157 = vmatprep.subr.bf16.mxu0 0
    %1158 = vmatpush1.bf16.msra.mxu0 %v1140
    %1159 = vmatprep.subr.bf16.mxu0 0
    %1160 = vmatpush1.bf16.msra.mxu0 %v1141
    %1161 = vmatprep.subr.bf16.mxu0 0
    %1162 = vmatpush1.bf16.msra.mxu0 %v1142
    %1163 = vmatprep.subr.bf16.mxu0 0
    %1164 = vmatpush1.bf16.msra.mxu0 %v1143
    %1165 = vmatprep.subr.bf16.mxu0 0
    %1166 = vmatpush1.bf16.msra.mxu0 %v1144
    %1167 = vmatprep.subr.bf16.mxu0 0
    %1168 = vmatpush1.bf16.msra.mxu0 %v1145
    %1169 = vmatprep.subr.bf16.mxu0 0
    %1170 = vmatpush1.bf16.msra.mxu0 %v1146
    %1171 = vmatprep.subr.bf16.mxu0 0
    %1172 = vmatpush1.bf16.msra.mxu0 0
    %1173 = vmatprep.subr.bf16.mxu0 0
    %1174 = vmatpush1.bf16.msra.mxu0 0
    %1175 = vmatprep.subr.bf16.mxu0 0
    %1176 = vmatpush1.bf16.msra.mxu0 0
    %1177 = vmatprep.subr.bf16.mxu0 0
    %1178 = vmatpush1.bf16.msra.mxu0 0
    %1179 = vmatprep.subr.bf16.mxu0 0
    %1180 = vmatpush1.bf16.msra.mxu0 0
    %1181 = vmatprep.subr.bf16.mxu0 0
    %1182 = vmatpush1.bf16.msra.mxu0 0
    %1183 = vmatprep.subr.bf16.mxu0 0
    %1184 = vmatpush1.bf16.msra.mxu0 0
    %1185 = vmatprep.subr.bf16.mxu0 0
    %1186 = vmatpush1.bf16.msra.mxu0 0
    %1187 = vmatprep.mubr.bf16.mxu0 0
    %1188 = vmatmul.mubr.bf16.gmra.mrb[0].mxu0 %v1083
    %v1189 = vpop.f32.mrb[0].mxu0
    %v1190 = vadd.f32 %v1105, %v1189
    %v1191 = vpop.f32.mrb[0].mxu0
    %v1192 = vpop.f32.mrb[0].mxu0
    %v1193 = vpop.f32.mrb[0].mxu0
    %1194 = vdwg.mxu0
    %vm1195 = vcmask 15360
    %1196 = vst.msk [vmem:[%s11] sm:$0xff] %vm1195, %v1190
    // Predicated region
    $region58: #{tpu_custom_call.1} parent=1 // pred_check
      _
    $region59: #{tpu_custom_call.1} parent=1 // pred_check_branch
      %1198 = sbr.rel (0) target = $region61
    $region60: #{tpu_custom_call.1} parent=1 // pred_region
      _
    $region61: #{tpu_custom_call.1} parent=1 // pred_fallthru
      _
    // Predicated region
    $region62: #{tpu_custom_call.1} parent=1 // pred_check
      _
    $region63: #{tpu_custom_call.1} parent=1 // pred_check_branch
      %1200 = sbr.rel (0) target = $region65
    $region64: #{tpu_custom_call.1} parent=1 // pred_region
      _
    $region65: #{tpu_custom_call.1} parent=1 // pred_fallthru
      _
    %1201 = vsyncpa [#allocation3], 1
    %1202 = vsyncpa [#allocation5], 1

</llo_original>
